<compile_context>
chip_gen: v7x
topology: tpu7x:2x2x1
jax: 0.10.0
libtpu: 0.0.40
codegen_flags: <defaults>
</compile_context>

<pallas_src>
import functools

import jax
import jax.numpy as jnp
from jax.experimental import pallas as pl
from jax.experimental.pallas import tpu as pltpu


def _round_up(n, m):
    return ((n + m - 1) // m) * m


# ---------------------------------------------------------------------------
# Parameter construction (mirrors ModelNFC.__init__, eval mode)
# ---------------------------------------------------------------------------
def init_model_nfc(key, sizes, orth_init=True, batch_norm=True, dropout=0.25):
    """Returns raw per-block params (PyTorch-equivalent, eval mode).

    Each block dict: {'w_t': (in, out), 'b': (1, out), 'scale': (1, out),
                      'shift': (1, out), 'activation': 'relu' | 'sigmoid'}
    scale/shift are the eval-mode BatchNorm affine (identity if no BN).
    """
    del dropout  # Dropout is identity in eval mode.
    # TODO(synk): train-mode dropout would need an in-kernel RNG mask (pltpu.prng_*).
    n_layers = len(sizes) - 1
    keys = jax.random.split(key, n_layers)
    orth = jax.nn.initializers.orthogonal()
    eps = 1e-5
    params = []
    for i in range(n_layers):
        in_size, out_size = sizes[i], sizes[i + 1]
        is_last = (i == n_layers - 1)
        if orth_init:
            # th.nn.init.orthogonal_(fc.weight): weight shape (out, in); bias = 0.01
            w = orth(keys[i], (out_size, in_size), jnp.float32)
            b = jnp.full((1, out_size), 0.01, jnp.float32)
        else:
            bound = 1.0 / jnp.sqrt(in_size)
            kw, kb = jax.random.split(keys[i])
            w = jax.random.uniform(kw, (out_size, in_size), jnp.float32, -bound, bound)
            b = jax.random.uniform(kb, (1, out_size), jnp.float32, -bound, bound)
        if batch_norm and not is_last:
            # BatchNorm1d init defaults: gamma=1, beta=0, running_mean=0, running_var=1.
            gamma = jnp.ones((1, out_size), jnp.float32)
            beta = jnp.zeros((1, out_size), jnp.float32)
            running_mean = jnp.zeros((1, out_size), jnp.float32)
            running_var = jnp.ones((1, out_size), jnp.float32)
            scale = gamma / jnp.sqrt(running_var + eps)
            shift = beta - running_mean * scale
        else:
            scale = jnp.ones((1, out_size), jnp.float32)
            shift = jnp.zeros((1, out_size), jnp.float32)
        params.append({
            "w_t": jnp.asarray(w).T,          # (in, out) so the kernel does x @ W
            "b": b,
            "scale": scale,
            "shift": shift,
            "activation": "sigmoid" if is_last else "relu",
        })
    return params


def fold_bn_params(params, param_dtype=jnp.float32):
    """Fold each block's eval-mode BN affine into the NEXT block's weights/bias.

    (relu_out * s + t) @ W + b == relu_out @ (s[:,None] * W) + (t @ W + b)
    Exact because the affine is immediately followed by a linear layer.
    Biases stay float32; weights may be stored in bf16 for v6e/v7x MXU.
    """
    folded = []
    carry = None  # (scale, shift) of previous block's BN, shapes (1, features)
    for p in params:
        w_t = p["w_t"]
        b = p["b"]
        if carry is not None:
            scale, shift = carry
            b = b + shift @ w_t                      # uses the ORIGINAL weights
            w_t = scale.reshape(-1, 1) * w_t         # row (input-feature) scaling
        folded.append({
            "w_t": w_t.astype(param_dtype),
            "b": b.astype(jnp.float32),
            "activation": p["activation"],
        })
        is_identity_bn = bool(
            jnp.all(p["scale"] == 1.0) and jnp.all(p["shift"] == 0.0))
        carry = None if is_identity_bn else (p["scale"], p["shift"])
    return folded


# ---------------------------------------------------------------------------
# Fused kernel: whole network in one pallas_call
# ---------------------------------------------------------------------------
def _fused_mlp_kernel(*refs, n_layers, activations):
    x_ref = refs[0]
    o_ref = refs[-1]
    h = x_ref[...].astype(jnp.float32)
    for i in range(n_layers):
        w = refs[1 + 2 * i][...]
        b = refs[2 + 2 * i][...]
        lhs = h.astype(w.dtype) if w.dtype != h.dtype else h   # bf16 MXU inputs if requested
        y = jnp.dot(lhs, w, preferred_element_type=jnp.float32) + b
        if activations[i] == "relu":
            h = jnp.maximum(y, 0.0)
        else:  # sigmoid; reciprocal routes to the EUP slot
            h = pl.reciprocal(1.0 + jnp.exp(-y), approx=True)
    o_ref[...] = h.astype(o_ref.dtype)


def model_nfc_forward(folded_params, x, *, tile_b=512, pad_out_lanes=True):
    """Run the fused network. x: (batch, in_features) float32."""
    batch, in_dim = x.shape
    n_layers = len(folded_params)
    activations = tuple(p["activation"] for p in folded_params)

    # Lane-dense output: zero-pad the LAST layer's out_features to a multiple of
    # 128 so the final store / output DMA is unmasked (vst, not vst.msk).  The
    # padded columns cost no extra vregs or matmul passes; slice them off after.
    w_last = folded_params[-1]["w_t"]
    b_last = folded_params[-1]["b"]
    out_dim = w_last.shape[1]
    out_pad = _round_up(out_dim, 128) if pad_out_lanes else out_dim
    if out_pad != out_dim:
        w_last = jnp.pad(w_last, ((0, 0), (0, out_pad - out_dim)))
        b_last = jnp.pad(b_last, ((0, 0), (0, out_pad - out_dim)))

    # Batch tiling: tile must be a multiple of 8 (sublane); pad batch to a
    # multiple of the tile, slice the padding off afterwards.
    tb = min(_round_up(tile_b, 8), _round_up(batch, 8))
    padded_b = _round_up(batch, tb)
    xp = x if padded_b == batch else jnp.pad(x, ((0, padded_b - batch), (0, 0)))

    inputs = [xp]
    in_specs = [pl.BlockSpec((tb, in_dim), lambda i: (i, 0))]
    for li, p in enumerate(folded_params):
        w = w_last if li == n_layers - 1 else p["w_t"]
        b = b_last if li == n_layers - 1 else p["b"]
        inputs += [w, b]
        # Weights/biases: full-array blocks, constant index -> VMEM-resident
        # across all batch-grid steps (no re-fetch between steps).
        in_specs += [pl.BlockSpec(w.shape, lambda i: (0, 0)),
                     pl.BlockSpec(b.shape, lambda i: (0, 0))]

    kernel = functools.partial(
        _fused_mlp_kernel, n_layers=n_layers, activations=activations)

    out = pl.pallas_call(
        kernel,
        out_shape=jax.ShapeDtypeStruct((padded_b, out_pad), jnp.float32),
        grid=(padded_b // tb,),
        in_specs=in_specs,
        out_specs=pl.BlockSpec((tb, out_pad), lambda i: (i, 0)),
        compiler_params=pltpu.CompilerParams(
            dimension_semantics=("parallel",)),
    )(*inputs)

    if padded_b != batch or out_pad != out_dim:
        out = out[:batch, :out_dim]
    return out


# ---------------------------------------------------------------------------
# Pure-JAX reference (original, unfolded PyTorch eval-mode semantics)
# ---------------------------------------------------------------------------
def model_nfc_reference(raw_params, x):
    for p in raw_params:
        y = x @ p["w_t"] + p["b"]
        y = jnp.maximum(y, 0.0) if p["activation"] == "relu" else jax.nn.sigmoid(y)
        x = y * p["scale"] + p["shift"]
    return x


if __name__ == "__main__":
    # ModelNFC(orth_init=True, batch_norm=True, dropout=0.25, 32, 64, 64, 16)
    sizes = (32, 64, 64, 16)
    batch = 8

    key = jax.random.PRNGKey(0)
    k_param, k_x, k_x2 = jax.random.split(key, 3)
    raw_params = init_model_nfc(k_param, sizes, orth_init=True,
                                batch_norm=True, dropout=0.25)
    folded_params = fold_bn_params(raw_params)      # f32 weights for exact parity

    # Primary check: small batch, single grid step, lane-padded output.
    x = jax.random.normal(k_x, (batch, sizes[0]), jnp.float32)
    out = jax.block_until_ready(model_nfc_forward(folded_params, x))
    ref = model_nfc_reference(raw_params, x)
    assert out.shape == (batch, sizes[-1]), out.shape
    assert jnp.allclose(out, ref, atol=2e-3, rtol=2e-3), (
        "mismatch vs reference", float(jnp.max(jnp.abs(out - ref))))

    # Secondary check: exercises the batch grid + padding path (3 tiles of 32).
    x2 = jax.random.normal(k_x2, (72, sizes[0]), jnp.float32)
    out2 = jax.block_until_ready(model_nfc_forward(folded_params, x2, tile_b=32))
    ref2 = model_nfc_reference(raw_params, x2)
    assert out2.shape == (72, sizes[-1]), out2.shape
    assert jnp.allclose(out2, ref2, atol=2e-3, rtol=2e-3), (
        "mismatch vs reference (gridded)", float(jnp.max(jnp.abs(out2 - ref2))))

    # Tertiary check: non-lane-padded output path still works.
    out3 = jax.block_until_ready(
        model_nfc_forward(folded_params, x, pad_out_lanes=False))
    assert jnp.allclose(out3, ref, atol=2e-3, rtol=2e-3), (
        "mismatch vs reference (unpadded out)", float(jnp.max(jnp.abs(out3 - ref))))

    print("KERNEL_OK")
</pallas_src>

<mosaic_0001>
module attributes {stable_mosaic.version = 11 : i64} {
  func.func @_fused_mlp_kernel(%arg0: i32, %arg1: memref<8x32xf32, #tpu.memory_space<vmem>>, %arg2: memref<32x64xf32, #tpu.memory_space<vmem>>, %arg3: memref<1x64xf32, #tpu.memory_space<vmem>>, %arg4: memref<64x64xf32, #tpu.memory_space<vmem>>, %arg5: memref<1x64xf32, #tpu.memory_space<vmem>>, %arg6: memref<64x128xf32, #tpu.memory_space<vmem>>, %arg7: memref<1x128xf32, #tpu.memory_space<vmem>>, %arg8: memref<8x128xf32, #tpu.memory_space<vmem>>) attributes {dimension_semantics = [#tpu.dimension_semantics<parallel>], iteration_bounds = array<i64: 1>, scalar_prefetch = 0 : i64, scratch_operands = 0 : i64, tpu.core_type = #tpu.core_type<tc>, window_params = [{transform_indices = @transform_0, window_bounds = array<i64: 8, 32>}, {pipeline_mode = #tpu.pipeline_mode<synchronous>, transform_indices = @transform_1, window_bounds = array<i64: 32, 64>}, {pipeline_mode = #tpu.pipeline_mode<synchronous>, transform_indices = @transform_2, window_bounds = array<i64: 1, 64>}, {pipeline_mode = #tpu.pipeline_mode<synchronous>, transform_indices = @transform_3, window_bounds = array<i64: 64, 64>}, {pipeline_mode = #tpu.pipeline_mode<synchronous>, transform_indices = @transform_4, window_bounds = array<i64: 1, 64>}, {pipeline_mode = #tpu.pipeline_mode<synchronous>, transform_indices = @transform_5, window_bounds = array<i64: 64, 128>}, {pipeline_mode = #tpu.pipeline_mode<synchronous>, transform_indices = @transform_6, window_bounds = array<i64: 1, 128>}, {transform_indices = @transform_7, window_bounds = array<i64: 8, 128>}]} {
    %c0 = arith.constant 0 : index
    %c0_0 = arith.constant 0 : index
    %0 = vector.load %arg1[%c0, %c0_0] : memref<8x32xf32, #tpu.memory_space<vmem>>, vector<8x32xf32>
    %c0_1 = arith.constant 0 : index
    %c0_2 = arith.constant 0 : index
    %1 = vector.load %arg2[%c0_1, %c0_2] : memref<32x64xf32, #tpu.memory_space<vmem>>, vector<32x64xf32>
    %c0_3 = arith.constant 0 : index
    %c0_4 = arith.constant 0 : index
    %2 = vector.load %arg3[%c0_3, %c0_4] : memref<1x64xf32, #tpu.memory_space<vmem>>, vector<1x64xf32>
    %cst = arith.constant dense<0.000000e+00> : vector<8x64xf32>
    %3 = tpu.matmul %0, %1, %cst {dimension_numbers = #tpu.dot_dimension_numbers<[1], [0], [0], [1], [0, 0, 1, 1], [], []>} : vector<8x32xf32>, vector<32x64xf32>, vector<8x64xf32> -> vector<8x64xf32>
    %4 = vector.broadcast %2 : vector<1x64xf32> to vector<8x64xf32>
    %5 = arith.addf %3, %4 : vector<8x64xf32>
    %cst_5 = arith.constant 0.000000e+00 : f32
    %6 = vector.broadcast %cst_5 : f32 to vector<8x64xf32>
    %7 = arith.maximumf %5, %6 : vector<8x64xf32>
    %c0_6 = arith.constant 0 : index
    %c0_7 = arith.constant 0 : index
    %8 = vector.load %arg4[%c0_6, %c0_7] : memref<64x64xf32, #tpu.memory_space<vmem>>, vector<64x64xf32>
    %c0_8 = arith.constant 0 : index
    %c0_9 = arith.constant 0 : index
    %9 = vector.load %arg5[%c0_8, %c0_9] : memref<1x64xf32, #tpu.memory_space<vmem>>, vector<1x64xf32>
    %cst_10 = arith.constant dense<0.000000e+00> : vector<8x64xf32>
    %10 = tpu.matmul %7, %8, %cst_10 {dimension_numbers = #tpu.dot_dimension_numbers<[1], [0], [0], [1], [0, 0, 1, 1], [], []>} : vector<8x64xf32>, vector<64x64xf32>, vector<8x64xf32> -> vector<8x64xf32>
    %11 = vector.broadcast %9 : vector<1x64xf32> to vector<8x64xf32>
    %12 = arith.addf %10, %11 : vector<8x64xf32>
    %cst_11 = arith.constant 0.000000e+00 : f32
    %13 = vector.broadcast %cst_11 : f32 to vector<8x64xf32>
    %14 = arith.maximumf %12, %13 : vector<8x64xf32>
    %c0_12 = arith.constant 0 : index
    %c0_13 = arith.constant 0 : index
    %15 = vector.load %arg6[%c0_12, %c0_13] : memref<64x128xf32, #tpu.memory_space<vmem>>, vector<64x128xf32>
    %c0_14 = arith.constant 0 : index
    %c0_15 = arith.constant 0 : index
    %16 = vector.load %arg7[%c0_14, %c0_15] : memref<1x128xf32, #tpu.memory_space<vmem>>, vector<1x128xf32>
    %cst_16 = arith.constant dense<0.000000e+00> : vector<8x128xf32>
    %17 = tpu.matmul %14, %15, %cst_16 {dimension_numbers = #tpu.dot_dimension_numbers<[1], [0], [0], [1], [0, 0, 1, 1], [], []>} : vector<8x64xf32>, vector<64x128xf32>, vector<8x128xf32> -> vector<8x128xf32>
    %18 = vector.broadcast %16 : vector<1x128xf32> to vector<8x128xf32>
    %19 = arith.addf %17, %18 : vector<8x128xf32>
    %cst_17 = arith.constant 0.000000e+00 : f32
    %20 = vector.broadcast %cst_17 : f32 to vector<8x128xf32>
    %21 = arith.subf %20, %19 : vector<8x128xf32>
    %22 = math.exp %21 : vector<8x128xf32>
    %cst_18 = arith.constant 1.000000e+00 : f32
    %23 = vector.broadcast %cst_18 : f32 to vector<8x128xf32>
    %24 = arith.addf %23, %22 : vector<8x128xf32>
    %25 = tpu.reciprocal %24 {approx = true} : vector<8x128xf32> -> vector<8x128xf32>
    %c0_19 = arith.constant 0 : index
    %c0_20 = arith.constant 0 : index
    %26 = vector.load %arg8[%c0_19, %c0_20] : memref<8x128xf32, #tpu.memory_space<vmem>>, vector<8x128xf32>
    tpu.vector_store %arg8[%c0_19, %c0_20], %25 {strides = array<i32>} : memref<8x128xf32, #tpu.memory_space<vmem>>, vector<8x128xf32>,
    return
  }
  func.func @transform_0(%arg0: i32) -> (i32, i32) {
    %c0_i32 = arith.constant 0 : i32
    %c0_i32_0 = arith.constant 0 : i32
    return %arg0, %c0_i32 : i32, i32
  }
  func.func @transform_1(%arg0: i32) -> (i32, i32) {
    %c0_i32 = arith.constant 0 : i32
    %c0_i32_0 = arith.constant 0 : i32
    %c0_i32_1 = arith.constant 0 : i32
    return %c0_i32, %c0_i32_0 : i32, i32
  }
  func.func @transform_2(%arg0: i32) -> (i32, i32) {
    %c0_i32 = arith.constant 0 : i32
    %c0_i32_0 = arith.constant 0 : i32
    %c0_i32_1 = arith.constant 0 : i32
    return %c0_i32, %c0_i32_0 : i32, i32
  }
  func.func @transform_3(%arg0: i32) -> (i32, i32) {
    %c0_i32 = arith.constant 0 : i32
    %c0_i32_0 = arith.constant 0 : i32
    %c0_i32_1 = arith.constant 0 : i32
    return %c0_i32, %c0_i32_0 : i32, i32
  }
  func.func @transform_4(%arg0: i32) -> (i32, i32) {
    %c0_i32 = arith.constant 0 : i32
    %c0_i32_0 = arith.constant 0 : i32
    %c0_i32_1 = arith.constant 0 : i32
    return %c0_i32, %c0_i32_0 : i32, i32
  }
  func.func @transform_5(%arg0: i32) -> (i32, i32) {
    %c0_i32 = arith.constant 0 : i32
    %c0_i32_0 = arith.constant 0 : i32
    %c0_i32_1 = arith.constant 0 : i32
    return %c0_i32, %c0_i32_0 : i32, i32
  }
  func.func @transform_6(%arg0: i32) -> (i32, i32) {
    %c0_i32 = arith.constant 0 : i32
    %c0_i32_0 = arith.constant 0 : i32
    %c0_i32_1 = arith.constant 0 : i32
    return %c0_i32, %c0_i32_0 : i32, i32
  }
  func.func @transform_7(%arg0: i32) -> (i32, i32) {
    %c0_i32 = arith.constant 0 : i32
    %c0_i32_0 = arith.constant 0 : i32
    return %arg0, %c0_i32 : i32, i32
  }
}

</mosaic_0001>

<llo_original>
// kernel: tpu_custom_call.1
$region0: #{tpu_custom_call.1}
  #allocation0 [shape = 'u32[]', space=smem, size = 0x4, offset = 0x4, fixed_abs, tag = 'smem constant byte address 0x4 - core index']
  #allocation1 [shape = 'u32[144,128]{1,0:T(1,128)}', space=vmem, size = 0x12000, scoped, tag = 'internal scratch']
  %s0 = inlined_call_operand.hbm [shape: f32[8,32], index: 0, kind: input, shape index: {}]
  %s1 = inlined_call_operand.hbm [shape: f32[32,64], index: 1, kind: input, shape index: {}]
  %s2 = inlined_call_operand.vmem [shape: f32[1,64], index: 2, kind: input, shape index: {}]
  %s3 = inlined_call_operand.hbm [shape: f32[64,64], index: 3, kind: input, shape index: {}]
  %s4 = inlined_call_operand.vmem [shape: f32[1,64], index: 4, kind: input, shape index: {}]
  %s5 = inlined_call_operand.hbm [shape: f32[64,128], index: 5, kind: input, shape index: {}]
  %s6 = inlined_call_operand.vmem [shape: f32[1,128], index: 6, kind: input, shape index: {}]
  %s7 = inlined_call_operand.hbm [shape: f32[8,128], index: 7, kind: output, shape index: {}]
  %s8 = sld [smem:[#allocation0]]
  $region54: #{tpu_custom_call.1} parent=0
    _
  %s10 = ssub.s32 1, %s8
  %s11 = scalar_select 0, %s10, %s8
  $region1: #{tpu_custom_call.1} parent=0
    #allocation2 [shape = 'u8[4096]{0}', space=vmem, size = 0x1000, scoped, tag = 'input window, operand 0, single buffered']
    #allocation3 [shape = 's32[1]{0}', space=sflag, size = 0x4, scoped, tag = 'scoped memory for tpu_custom_call.1']
    #allocation4 [shape = 's32[1]{0}', space=sflag, size = 0x4, scoped, tag = 'scoped memory for tpu_custom_call.1']
    #allocation5 [shape = 'u8[16384]{0}', space=vmem, size = 0x4000, scoped, tag = 'input window, operand 1, single buffered']
    #allocation6 [shape = 's32[1]{0}', space=sflag, size = 0x4, scoped, tag = 'scoped memory for tpu_custom_call.1']
    #allocation7 [shape = 'u8[32768]{0}', space=vmem, size = 0x8000, scoped, tag = 'input window, operand 3, single buffered']
    #allocation8 [shape = 'u8[32768]{0}', space=vmem, size = 0x8000, scoped, tag = 'input window, operand 5, single buffered']
    #allocation9 [shape = 's32[1]{0}', space=sflag, size = 0x4, scoped, tag = 'scoped memory for tpu_custom_call.1']
    #allocation10 [shape = 'u8[4096]{0}', space=vmem, size = 0x1000, scoped, tag = 'output window, operand 0, single buffered']
    %12 = vsyncpa [#allocation3], 0
    %13 = vsyncpa [#allocation6], 0
    %14 = vsyncpa [#allocation9], 0
    %15 = vsyncpa [#allocation4], 0
    // Predicated region
    $region2: #{tpu_custom_call.1} parent=1 // pred_check
      _
    $region3: #{tpu_custom_call.1} parent=1 // pred_check_branch
      %17 = sbr.rel (0) target = $region5
    $region4: #{tpu_custom_call.1} parent=1 // pred_region
      %s19 = ssub.s32 128, 128
      %20 = vsyncadd [#allocation3], %s19
      %s22 = sshll.u32 [#allocation2], 4
      %s23 = int_to_ptr.vmem [resolvable:$true] %s22
      %25 = dma.hbm_to_vmem [thread:$0]  %s0, 128, %s23, [#allocation3]
    $region5: #{tpu_custom_call.1} parent=1 // pred_fallthru
      _
    // Predicated region
    $region6: #{tpu_custom_call.1} parent=1 // pred_check
      _
    $region7: #{tpu_custom_call.1} parent=1 // pred_check_branch
      %27 = sbr.rel (0) target = $region9
    $region8: #{tpu_custom_call.1} parent=1 // pred_region
      %s29 = ssub.s32 512, 512
      %30 = vsyncadd [#allocation6], %s29
      %s31 = sshll.u32 [#allocation5], 4
      %s32 = int_to_ptr.vmem [resolvable:$true] %s31
      %37 = dma.hbm_to_vmem [thread:$0]  %s1, 512, %s32, [#allocation6], 128, 128, 8
    $region9: #{tpu_custom_call.1} parent=1 // pred_fallthru
      _
    // Predicated region
    $region10: #{tpu_custom_call.1} parent=1 // pred_check
      _
    $region11: #{tpu_custom_call.1} parent=1 // pred_check_branch
      %39 = sbr.rel (0) target = $region13
    $region12: #{tpu_custom_call.1} parent=1 // pred_region
      _
    $region13: #{tpu_custom_call.1} parent=1 // pred_fallthru
      _
    // Predicated region
    $region14: #{tpu_custom_call.1} parent=1 // pred_check
      _
    $region15: #{tpu_custom_call.1} parent=1 // pred_check_branch
      %41 = sbr.rel (0) target = $region17
    $region16: #{tpu_custom_call.1} parent=1 // pred_region
      %s43 = ssub.s32 1024, 1024
      %44 = vsyncadd [#allocation6], %s43
      %s45 = sshll.u32 [#allocation7], 4
      %s46 = int_to_ptr.vmem [resolvable:$true] %s45
      %51 = dma.hbm_to_vmem [thread:$0]  %s3, 1024, %s46, [#allocation6], 128, 128, 8
    $region17: #{tpu_custom_call.1} parent=1 // pred_fallthru
      _
    // Predicated region
    $region18: #{tpu_custom_call.1} parent=1 // pred_check
      _
    $region19: #{tpu_custom_call.1} parent=1 // pred_check_branch
      %53 = sbr.rel (0) target = $region21
    $region20: #{tpu_custom_call.1} parent=1 // pred_region
      _
    $region21: #{tpu_custom_call.1} parent=1 // pred_fallthru
      _
    // Predicated region
    $region22: #{tpu_custom_call.1} parent=1 // pred_check
      _
    $region23: #{tpu_custom_call.1} parent=1 // pred_check_branch
      %55 = sbr.rel (0) target = $region25
    $region24: #{tpu_custom_call.1} parent=1 // pred_region
      %s57 = ssub.s32 1024, 1024
      %58 = vsyncadd [#allocation9], %s57
      %s59 = sshll.u32 [#allocation8], 4
      %s60 = int_to_ptr.vmem [resolvable:$true] %s59
      %65 = dma.hbm_to_vmem [thread:$0]  %s5, 1024, %s60, [#allocation9], 128, 128, 8
    $region25: #{tpu_custom_call.1} parent=1 // pred_fallthru
      _
    // Predicated region
    $region26: #{tpu_custom_call.1} parent=1 // pred_check
      _
    $region27: #{tpu_custom_call.1} parent=1 // pred_check_branch
      %67 = sbr.rel (0) target = $region29
    $region28: #{tpu_custom_call.1} parent=1 // pred_region
      _
    $region29: #{tpu_custom_call.1} parent=1 // pred_fallthru
      _
    // Predicated region
    $region30: #{tpu_custom_call.1} parent=1 // pred_check
      _
    $region31: #{tpu_custom_call.1} parent=1 // pred_check_branch
      %69 = sbr.rel (0) target = $region33
    $region32: #{tpu_custom_call.1} parent=1 // pred_region
      %70 = dma.done [#allocation3], 128
    $region33: #{tpu_custom_call.1} parent=1 // pred_fallthru
      _
    // Predicated region
    $region34: #{tpu_custom_call.1} parent=1 // pred_check
      _
    $region35: #{tpu_custom_call.1} parent=1 // pred_check_branch
      %72 = sbr.rel (0) target = $region37
    $region36: #{tpu_custom_call.1} parent=1 // pred_region
      %73 = dma.done [#allocation6], 512
    $region37: #{tpu_custom_call.1} parent=1 // pred_fallthru
      _
    // Predicated region
    $region38: #{tpu_custom_call.1} parent=1 // pred_check
      _
    $region39: #{tpu_custom_call.1} parent=1 // pred_check_branch
      %75 = sbr.rel (0) target = $region41
    $region40: #{tpu_custom_call.1} parent=1 // pred_region
      %76 = dma.done [#allocation6], 1024
    $region41: #{tpu_custom_call.1} parent=1 // pred_fallthru
      _
    // Predicated region
    $region42: #{tpu_custom_call.1} parent=1 // pred_check
      _
    $region43: #{tpu_custom_call.1} parent=1 // pred_check_branch
      %78 = sbr.rel (0) target = $region45
    $region44: #{tpu_custom_call.1} parent=1 // pred_region
      %79 = dma.done [#allocation9], 1024
    $region45: #{tpu_custom_call.1} parent=1 // pred_fallthru
      _
    %v80 = vld [vmem:[#allocation2] sm:$0xff]
    %v81 = vld [vmem:[#allocation5] sm:$0xff]
    %v82 = vld [vmem:[#allocation5 + $0x8] sm:$0xff]
    %v83 = vld [vmem:[#allocation5 + $0x10] sm:$0xff]
    %v84 = vld [vmem:[#allocation5 + $0x18] sm:$0xff]
    %v85 = vld [vmem:[%s2] sm:$0x1]
    %v87 = vlaneseq
    %v88 = vshrl.u32 %v87, 7
    %v89 = vsub.s32 0, %v88
    %v90 = vrot.slane %v85, %v89
    %vm92 = vcmask 261120
    %v94 = vsel %vm92, %v80, 0
    %96 = vmatprep.subr.mxu0 0.0
    %97 = vmatpush1.msra.mxu0 %v81
    %98 = vmatprep.subr.mxu0 0.0
    %99 = vmatpush1.msra.mxu0 %v82
    %100 = vmatprep.subr.mxu0 0.0
    %101 = vmatpush1.msra.mxu0 %v83
    %102 = vmatprep.subr.mxu0 0.0
    %103 = vmatpush1.msra.mxu0 %v84
    %104 = vmatprep.subr.mxu0 0.0
    %105 = vmatpush1.msra.mxu0 0.0
    %106 = vmatprep.subr.mxu0 0.0
    %107 = vmatpush1.msra.mxu0 0.0
    %108 = vmatprep.subr.mxu0 0.0
    %109 = vmatpush1.msra.mxu0 0.0
    %110 = vmatprep.subr.mxu0 0.0
    %111 = vmatpush1.msra.mxu0 0.0
    %112 = vmatprep.subr.mxu0 0.0
    %113 = vmatpush1.msra.mxu0 0.0
    %114 = vmatprep.subr.mxu0 0.0
    %115 = vmatpush1.msra.mxu0 0.0
    %116 = vmatprep.subr.mxu0 0.0
    %117 = vmatpush1.msra.mxu0 0.0
    %118 = vmatprep.subr.mxu0 0.0
    %119 = vmatpush1.msra.mxu0 0.0
    %120 = vmatprep.subr.mxu0 0.0
    %121 = vmatpush1.msra.mxu0 0.0
    %122 = vmatprep.subr.mxu0 0.0
    %123 = vmatpush1.msra.mxu0 0.0
    %124 = vmatprep.subr.mxu0 0.0
    %125 = vmatpush1.msra.mxu0 0.0
    %126 = vmatprep.subr.mxu0 0.0
    %127 = vmatpush1.msra.mxu0 0.0
    %128 = vmatprep.subr.mxu0 0.0
    %129 = vmatpush1.msra.mxu0 0.0
    %130 = vmatprep.subr.mxu0 0.0
    %131 = vmatpush1.msra.mxu0 0.0
    %132 = vmatprep.subr.mxu0 0.0
    %133 = vmatpush1.msra.mxu0 0.0
    %134 = vmatprep.subr.mxu0 0.0
    %135 = vmatpush1.msra.mxu0 0.0
    %136 = vmatprep.subr.mxu0 0.0
    %137 = vmatpush1.msra.mxu0 0.0
    %138 = vmatprep.subr.mxu0 0.0
    %139 = vmatpush1.msra.mxu0 0.0
    %140 = vmatprep.subr.mxu0 0.0
    %141 = vmatpush1.msra.mxu0 0.0
    %142 = vmatprep.subr.mxu0 0.0
    %143 = vmatpush1.msra.mxu0 0.0
    %144 = vmatprep.subr.mxu0 0.0
    %145 = vmatpush1.msra.mxu0 0.0
    %146 = vmatprep.subr.mxu0 0.0
    %147 = vmatpush1.msra.mxu0 0.0
    %148 = vmatprep.subr.mxu0 0.0
    %149 = vmatpush1.msra.mxu0 0.0
    %150 = vmatprep.subr.mxu0 0.0
    %151 = vmatpush1.msra.mxu0 0.0
    %152 = vmatprep.subr.mxu0 0.0
    %153 = vmatpush1.msra.mxu0 0.0
    %154 = vmatprep.subr.mxu0 0.0
    %155 = vmatpush1.msra.mxu0 0.0
    %156 = vmatprep.subr.mxu0 0.0
    %157 = vmatpush1.msra.mxu0 0.0
    %158 = vmatprep.subr.mxu0 0.0
    %159 = vmatpush1.msra.mxu0 0.0
    %160 = vmatprep.mubr.f32.mxu0 0.0
    %161 = vmatmul.mubr.f32.gmra.mrb[0].mxu0 %v94
    %v162 = vpop.f32.mrb[0].mxu0
    %v163 = vadd.f32 %v90, %v162
    %v164 = vpop.f32.mrb[0].mxu0
    %165 = vdwg.mxu0
    %v166 = vmax.f32 %v163, 0.0
    %v167 = vld [vmem:[#allocation7] sm:$0xff]
    %v168 = vld [vmem:[#allocation7 + $0x8] sm:$0xff]
    %v169 = vld [vmem:[#allocation7 + $0x10] sm:$0xff]
    %v170 = vld [vmem:[#allocation7 + $0x18] sm:$0xff]
    %v171 = vld [vmem:[#allocation7 + $0x20] sm:$0xff]
    %v172 = vld [vmem:[#allocation7 + $0x28] sm:$0xff]
    %v173 = vld [vmem:[#allocation7 + $0x30] sm:$0xff]
    %v174 = vld [vmem:[#allocation7 + $0x38] sm:$0xff]
    %v175 = vld [vmem:[%s4] sm:$0x1]
    %v177 = vlaneseq
    %v178 = vshrl.u32 %v177, 7
    %v179 = vsub.s32 0, %v178
    %v180 = vrot.slane %v175, %v179
    %vm182 = vcmask 523264
    %v184 = vsel %vm182, %v166, 0
    %186 = vmatprep.subr.mxu0 0.0
    %187 = vmatpush1.msra.mxu0 %v167
    %188 = vmatprep.subr.mxu0 0.0
    %189 = vmatpush1.msra.mxu0 %v168
    %190 = vmatprep.subr.mxu0 0.0
    %191 = vmatpush1.msra.mxu0 %v169
    %192 = vmatprep.subr.mxu0 0.0
    %193 = vmatpush1.msra.mxu0 %v170
    %194 = vmatprep.subr.mxu0 0.0
    %195 = vmatpush1.msra.mxu0 %v171
    %196 = vmatprep.subr.mxu0 0.0
    %197 = vmatpush1.msra.mxu0 %v172
    %198 = vmatprep.subr.mxu0 0.0
    %199 = vmatpush1.msra.mxu0 %v173
    %200 = vmatprep.subr.mxu0 0.0
    %201 = vmatpush1.msra.mxu0 %v174
    %202 = vmatprep.subr.mxu0 0.0
    %203 = vmatpush1.msra.mxu0 0.0
    %204 = vmatprep.subr.mxu0 0.0
    %205 = vmatpush1.msra.mxu0 0.0
    %206 = vmatprep.subr.mxu0 0.0
    %207 = vmatpush1.msra.mxu0 0.0
    %208 = vmatprep.subr.mxu0 0.0
    %209 = vmatpush1.msra.mxu0 0.0
    %210 = vmatprep.subr.mxu0 0.0
    %211 = vmatpush1.msra.mxu0 0.0
    %212 = vmatprep.subr.mxu0 0.0
    %213 = vmatpush1.msra.mxu0 0.0
    %214 = vmatprep.subr.mxu0 0.0
    %215 = vmatpush1.msra.mxu0 0.0
    %216 = vmatprep.subr.mxu0 0.0
    %217 = vmatpush1.msra.mxu0 0.0
    %218 = vmatprep.subr.mxu0 0.0
    %219 = vmatpush1.msra.mxu0 0.0
    %220 = vmatprep.subr.mxu0 0.0
    %221 = vmatpush1.msra.mxu0 0.0
    %222 = vmatprep.subr.mxu0 0.0
    %223 = vmatpush1.msra.mxu0 0.0
    %224 = vmatprep.subr.mxu0 0.0
    %225 = vmatpush1.msra.mxu0 0.0
    %226 = vmatprep.subr.mxu0 0.0
    %227 = vmatpush1.msra.mxu0 0.0
    %228 = vmatprep.subr.mxu0 0.0
    %229 = vmatpush1.msra.mxu0 0.0
    %230 = vmatprep.subr.mxu0 0.0
    %231 = vmatpush1.msra.mxu0 0.0
    %232 = vmatprep.subr.mxu0 0.0
    %233 = vmatpush1.msra.mxu0 0.0
    %234 = vmatprep.subr.mxu0 0.0
    %235 = vmatpush1.msra.mxu0 0.0
    %236 = vmatprep.subr.mxu0 0.0
    %237 = vmatpush1.msra.mxu0 0.0
    %238 = vmatprep.subr.mxu0 0.0
    %239 = vmatpush1.msra.mxu0 0.0
    %240 = vmatprep.subr.mxu0 0.0
    %241 = vmatpush1.msra.mxu0 0.0
    %242 = vmatprep.subr.mxu0 0.0
    %243 = vmatpush1.msra.mxu0 0.0
    %244 = vmatprep.subr.mxu0 0.0
    %245 = vmatpush1.msra.mxu0 0.0
    %246 = vmatprep.subr.mxu0 0.0
    %247 = vmatpush1.msra.mxu0 0.0
    %248 = vmatprep.subr.mxu0 0.0
    %249 = vmatpush1.msra.mxu0 0.0
    %250 = vmatprep.mubr.f32.mxu0 0.0
    %251 = vmatmul.mubr.f32.gmra.mrb[0].mxu0 %v184
    %v252 = vpop.f32.mrb[0].mxu0
    %v253 = vadd.f32 %v180, %v252
    %v254 = vpop.f32.mrb[0].mxu0
    %255 = vdwg.mxu0
    %v256 = vmax.f32 %v253, 0.0
    %v257 = vld [vmem:[#allocation8] sm:$0xff]
    %v258 = vld [vmem:[#allocation8 + $0x8] sm:$0xff]
    %v259 = vld [vmem:[#allocation8 + $0x10] sm:$0xff]
    %v260 = vld [vmem:[#allocation8 + $0x18] sm:$0xff]
    %v261 = vld [vmem:[#allocation8 + $0x20] sm:$0xff]
    %v262 = vld [vmem:[#allocation8 + $0x28] sm:$0xff]
    %v263 = vld [vmem:[#allocation8 + $0x30] sm:$0xff]
    %v264 = vld [vmem:[#allocation8 + $0x38] sm:$0xff]
    %v265 = vld [vmem:[%s6] sm:$0x1]
    %v267 = vlaneseq
    %v268 = vshrl.u32 %v267, 7
    %v269 = vsub.s32 0, %v268
    %v270 = vrot.slane %v265, %v269
    %v273 = vsel %vm182, %v256, 0
    %275 = vmatprep.subr.mxu0 0.0
    %276 = vmatpush1.msra.mxu0 %v257
    %277 = vmatprep.subr.mxu0 0.0
    %278 = vmatpush1.msra.mxu0 %v258
    %279 = vmatprep.subr.mxu0 0.0
    %280 = vmatpush1.msra.mxu0 %v259
    %281 = vmatprep.subr.mxu0 0.0
    %282 = vmatpush1.msra.mxu0 %v260
    %283 = vmatprep.subr.mxu0 0.0
    %284 = vmatpush1.msra.mxu0 %v261
    %285 = vmatprep.subr.mxu0 0.0
    %286 = vmatpush1.msra.mxu0 %v262
    %287 = vmatprep.subr.mxu0 0.0
    %288 = vmatpush1.msra.mxu0 %v263
    %289 = vmatprep.subr.mxu0 0.0
    %290 = vmatpush1.msra.mxu0 %v264
    %291 = vmatprep.subr.mxu0 0.0
    %292 = vmatpush1.msra.mxu0 0.0
    %293 = vmatprep.subr.mxu0 0.0
    %294 = vmatpush1.msra.mxu0 0.0
    %295 = vmatprep.subr.mxu0 0.0
    %296 = vmatpush1.msra.mxu0 0.0
    %297 = vmatprep.subr.mxu0 0.0
    %298 = vmatpush1.msra.mxu0 0.0
    %299 = vmatprep.subr.mxu0 0.0
    %300 = vmatpush1.msra.mxu0 0.0
    %301 = vmatprep.subr.mxu0 0.0
    %302 = vmatpush1.msra.mxu0 0.0
    %303 = vmatprep.subr.mxu0 0.0
    %304 = vmatpush1.msra.mxu0 0.0
    %305 = vmatprep.subr.mxu0 0.0
    %306 = vmatpush1.msra.mxu0 0.0
    %307 = vmatprep.subr.mxu0 0.0
    %308 = vmatpush1.msra.mxu0 0.0
    %309 = vmatprep.subr.mxu0 0.0
    %310 = vmatpush1.msra.mxu0 0.0
    %311 = vmatprep.subr.mxu0 0.0
    %312 = vmatpush1.msra.mxu0 0.0
    %313 = vmatprep.subr.mxu0 0.0
    %314 = vmatpush1.msra.mxu0 0.0
    %315 = vmatprep.subr.mxu0 0.0
    %316 = vmatpush1.msra.mxu0 0.0
    %317 = vmatprep.subr.mxu0 0.0
    %318 = vmatpush1.msra.mxu0 0.0
    %319 = vmatprep.subr.mxu0 0.0
    %320 = vmatpush1.msra.mxu0 0.0
    %321 = vmatprep.subr.mxu0 0.0
    %322 = vmatpush1.msra.mxu0 0.0
    %323 = vmatprep.subr.mxu0 0.0
    %324 = vmatpush1.msra.mxu0 0.0
    %325 = vmatprep.subr.mxu0 0.0
    %326 = vmatpush1.msra.mxu0 0.0
    %327 = vmatprep.subr.mxu0 0.0
    %328 = vmatpush1.msra.mxu0 0.0
    %329 = vmatprep.subr.mxu0 0.0
    %330 = vmatpush1.msra.mxu0 0.0
    %331 = vmatprep.subr.mxu0 0.0
    %332 = vmatpush1.msra.mxu0 0.0
    %333 = vmatprep.subr.mxu0 0.0
    %334 = vmatpush1.msra.mxu0 0.0
    %335 = vmatprep.subr.mxu0 0.0
    %336 = vmatpush1.msra.mxu0 0.0
    %337 = vmatprep.subr.mxu0 0.0
    %338 = vmatpush1.msra.mxu0 0.0
    %339 = vmatprep.mubr.f32.mxu0 0.0
    %340 = vmatmul.mubr.f32.gmra.mrb[0].mxu0 %v273
    %v341 = vpop.f32.mrb[0].mxu0
    %v342 = vadd.f32 %v270, %v341
    %v343 = vpop.f32.mrb[0].mxu0
    %344 = vdwg.mxu0
    %v345 = vsub.f32 0.0, %v342
    %v346 = vmul.f32 %v345, 1.442695
    %v347 = vpow.pop %v346
    %v348 = vadd.f32 %v347, 1.0
    %v349 = vrcp.pop %v348
    %350 = vst [vmem:[#allocation10] sm:$0xff] %v349
    // Predicated region
    $region46: #{tpu_custom_call.1} parent=1 // pred_check
      _
    $region47: #{tpu_custom_call.1} parent=1 // pred_check_branch
      %352 = sbr.rel (0) target = $region49
    $region48: #{tpu_custom_call.1} parent=1 // pred_region
      %s354 = ssub.s32 128, 128
      %355 = vsyncadd [#allocation4], %s354
      %s357 = sshll.u32 [#allocation10], 4
      %s358 = int_to_ptr.vmem [resolvable:$true] %s357
      %360 = dma.vmem_to_hbm [thread:$0]  %s358, 128, %s7, [#allocation4]
    $region49: #{tpu_custom_call.1} parent=1 // pred_fallthru
      _
    // Predicated region
    $region50: #{tpu_custom_call.1} parent=1 // pred_check
      _
    $region51: #{tpu_custom_call.1} parent=1 // pred_check_branch
      %362 = sbr.rel (0) target = $region53
    $region52: #{tpu_custom_call.1} parent=1 // pred_region
      %363 = dma.done [#allocation4], 128
    $region53: #{tpu_custom_call.1} parent=1 // pred_fallthru
      _
    %364 = vsyncpa [#allocation3], 1
    %365 = vsyncpa [#allocation6], 1
    %366 = vsyncpa [#allocation9], 1
    %367 = vsyncpa [#allocation4], 1

</llo_original>
